<compile_context>
chip_gen: v5e
topology: v5e:2x2
jax: 0.10.0
libtpu: 0.0.40
codegen_flags: <defaults>
</compile_context>

<pallas_src>
import jax
import jax.numpy as jnp
from jax.experimental import pallas as pl
from jax.experimental.pallas import tpu as pltpu

_LANES = 128
_TARGET_BLOCK_BYTES = 4 * 1024 * 1024   # ~4 MiB per block (dtype-aware rows below)
_VMEM_LIMIT_BYTES = 32 * 1024 * 1024    # explicit: above v5e's 16 MiB scoped default,
                                        # within physical VMEM on v5e/v6e/v7x


def _cdiv(a, b):
    return -(-a // b)


def _round_up(a, b):
    return _cdiv(a, b) * b


def _confidence_kernel(w_ref, b_ref, x_ref, o_ref):
    # w_ref, b_ref: (1, 1) f32 scalars in SMEM
    # x_ref, o_ref: one block of the input/output in VMEM (native dtype)
    w = w_ref[0, 0]
    b = b_ref[0, 0]
    z = x_ref[...].astype(jnp.float32) * w + b
    # sigmoid(z) = 0.5 * tanh(0.5 * z) + 0.5  -> tanh on EUP, mul/add on VPU
    y = 0.5 * jnp.tanh(0.5 * z) + 0.5
    o_ref[...] = y.astype(o_ref.dtype)


def _pick_tile_rows(rows, itemsize):
    """Dtype-aware block rows (~4 MiB/block), >= 2 balanced grid steps when possible."""
    sub = max(8, 32 // itemsize)          # sublane multiple: f32 -> 8, bf16 -> 16, int8 -> 32
    if rows <= sub:
        return rows                       # single whole-array block (can't split further)
    max_rows = max(sub, (_TARGET_BLOCK_BYTES // (_LANES * itemsize)) // sub * sub)
    num_blocks = _cdiv(rows, max_rows)
    if num_blocks == 1:
        num_blocks = 2                    # give v7x's two TensorCores one block each
    elif num_blocks % 2 == 1:
        num_blocks += 1                   # even grid -> neither TC idles on the tail step
    tile_rows = _round_up(_cdiv(rows, num_blocks), sub)
    return min(tile_rows, max_rows)


def confidence_learner(x, w, b):
    """x: any-shaped float array. w, b: scalar params. Returns sigmoid(w*x + b), same shape/dtype."""
    orig_shape = x.shape
    dtype = x.dtype
    n = x.size
    itemsize = jnp.dtype(dtype).itemsize

    w_smem = jnp.asarray(w, jnp.float32).reshape(1, 1)
    b_smem = jnp.asarray(b, jnp.float32).reshape(1, 1)

    cost = pl.CostEstimate(
        flops=3 * n,                      # mul + add + blend-ish per element
        transcendentals=n,                # one tanh per element
        bytes_accessed=2 * n * itemsize,  # one read + one write
    )
    cparams = pltpu.CompilerParams(
        dimension_semantics=("parallel",),
        vmem_limit_bytes=_VMEM_LIMIT_BYTES,
    )

    if n % _LANES == 0:
        # Common case: lane-dense (rows, 128) view -- pure metadata reshape, no HBM copy.
        rows = n // _LANES
        tile_rows = _pick_tile_rows(rows, itemsize)
        grid = (_cdiv(rows, tile_rows),)
        x2d = x.reshape(rows, _LANES)
        out2d = pl.pallas_call(
            _confidence_kernel,
            out_shape=jax.ShapeDtypeStruct((rows, _LANES), dtype),
            grid_spec=pltpu.PrefetchScalarGridSpec(
                num_scalar_prefetch=0,
                grid=grid,
                in_specs=[
                    pl.BlockSpec(memory_space=pltpu.SMEM),                 # w
                    pl.BlockSpec(memory_space=pltpu.SMEM),                 # b
                    pl.BlockSpec((tile_rows, _LANES), lambda i: (i, 0)),   # x
                ],
                out_specs=pl.BlockSpec((tile_rows, _LANES), lambda i: (i, 0)),
            ),
            compiler_params=cparams,
            cost_estimate=cost,
        )(w_smem, b_smem, x2d)
        return out2d.reshape(orig_shape)

    # Unaligned tail (n % 128 != 0): flat 1-D blocks, no pad / slice round trip.
    # Pallas masks the partial final block's store, so the garbage in the padded
    # read lanes never reaches HBM.
    rows = _cdiv(n, _LANES)
    tile_elems = _pick_tile_rows(rows, itemsize) * _LANES
    grid = (_cdiv(n, tile_elems),)
    flat = x.reshape(-1)
    out_flat = pl.pallas_call(
        _confidence_kernel,
        out_shape=jax.ShapeDtypeStruct((n,), dtype),
        grid_spec=pltpu.PrefetchScalarGridSpec(
            num_scalar_prefetch=0,
            grid=grid,
            in_specs=[
                pl.BlockSpec(memory_space=pltpu.SMEM),          # w
                pl.BlockSpec(memory_space=pltpu.SMEM),          # b
                pl.BlockSpec((tile_elems,), lambda i: (i,)),    # x
            ],
            out_specs=pl.BlockSpec((tile_elems,), lambda i: (i,)),
        ),
        compiler_params=cparams,
        cost_estimate=cost,
    )(w_smem, b_smem, flat)
    return out_flat.reshape(orig_shape)


if __name__ == "__main__":
    key = jax.random.PRNGKey(0)
    # Small NCHW input consistent with a conv-style pipeline (2048 elems -> 2 grid steps).
    x = jax.random.normal(key, (2, 4, 16, 16), dtype=jnp.float32)

    # Deterministic parameter init matching nn.Parameter(torch.Tensor([1.0]))
    w = jnp.float32(1.0)
    b = jnp.float32(1.0)

    y = confidence_learner(x, w, b)
    y = jax.block_until_ready(y)

    # Correctness check against plain-JAX reference.
    y_ref = jax.nn.sigmoid(w * x + b)
    assert y.shape == x.shape and y.dtype == x.dtype
    assert jnp.allclose(y, y_ref, atol=1e-5, rtol=1e-5), float(jnp.max(jnp.abs(y - y_ref)))

    print("KERNEL_OK")
</pallas_src>

<mosaic_0001>
module attributes {stable_mosaic.version = 11 : i64} {
  func.func @_confidence_kernel(%arg0: i32, %arg1: memref<1x1xf32, #tpu.memory_space<smem>>, %arg2: memref<1x1xf32, #tpu.memory_space<smem>>, %arg3: memref<8x128xf32, #tpu.memory_space<vmem>>, %arg4: memref<8x128xf32, #tpu.memory_space<vmem>>) attributes {dimension_semantics = [#tpu.dimension_semantics<parallel>], iteration_bounds = array<i64: 2>, scalar_prefetch = 0 : i64, scratch_operands = 0 : i64, tpu.core_type = #tpu.core_type<tc>, window_params = [{transform_indices = @transform_0, window_bounds = array<i64: 1, 1>}, {transform_indices = @transform_1, window_bounds = array<i64: 1, 1>}, {transform_indices = @transform_2, window_bounds = array<i64: 8, 128>}, {transform_indices = @transform_3, window_bounds = array<i64: 8, 128>}]} {
    %c0 = arith.constant 0 : index
    %c0_0 = arith.constant 0 : index
    %0 = memref.load %arg1[%c0, %c0_0] : memref<1x1xf32, #tpu.memory_space<smem>>
    %c0_1 = arith.constant 0 : index
    %c0_2 = arith.constant 0 : index
    %1 = memref.load %arg2[%c0_1, %c0_2] : memref<1x1xf32, #tpu.memory_space<smem>>
    %c0_3 = arith.constant 0 : index
    %c0_4 = arith.constant 0 : index
    %2 = vector.load %arg3[%c0_3, %c0_4] : memref<8x128xf32, #tpu.memory_space<vmem>>, vector<8x128xf32>
    %3 = vector.broadcast %0 : f32 to vector<8x128xf32>
    %4 = arith.mulf %2, %3 : vector<8x128xf32>
    %5 = vector.broadcast %1 : f32 to vector<8x128xf32>
    %6 = arith.addf %4, %5 : vector<8x128xf32>
    %cst = arith.constant 5.000000e-01 : f32
    %7 = vector.broadcast %cst : f32 to vector<8x128xf32>
    %8 = arith.mulf %7, %6 : vector<8x128xf32>
    %9 = math.tanh %8 : vector<8x128xf32>
    %cst_5 = arith.constant 5.000000e-01 : f32
    %10 = vector.broadcast %cst_5 : f32 to vector<8x128xf32>
    %11 = arith.mulf %10, %9 : vector<8x128xf32>
    %cst_6 = arith.constant 5.000000e-01 : f32
    %12 = vector.broadcast %cst_6 : f32 to vector<8x128xf32>
    %13 = arith.addf %11, %12 : vector<8x128xf32>
    %c0_7 = arith.constant 0 : index
    %c0_8 = arith.constant 0 : index
    %14 = vector.load %arg4[%c0_7, %c0_8] : memref<8x128xf32, #tpu.memory_space<vmem>>, vector<8x128xf32>
    tpu.vector_store %arg4[%c0_7, %c0_8], %13 {strides = array<i32>} : memref<8x128xf32, #tpu.memory_space<vmem>>, vector<8x128xf32>,
    return
  }
  func.func @transform_0(%arg0: i32) -> (i32, i32) {
    %c0_i32 = arith.constant 0 : i32
    %c0_i32_0 = arith.constant 0 : i32
    %c0_i32_1 = arith.constant 0 : i32
    return %c0_i32, %c0_i32_0 : i32, i32
  }
  func.func @transform_1(%arg0: i32) -> (i32, i32) {
    %c0_i32 = arith.constant 0 : i32
    %c0_i32_0 = arith.constant 0 : i32
    %c0_i32_1 = arith.constant 0 : i32
    return %c0_i32, %c0_i32_0 : i32, i32
  }
  func.func @transform_2(%arg0: i32) -> (i32, i32) {
    %c0_i32 = arith.constant 0 : i32
    %c0_i32_0 = arith.constant 0 : i32
    return %arg0, %c0_i32 : i32, i32
  }
  func.func @transform_3(%arg0: i32) -> (i32, i32) {
    %c0_i32 = arith.constant 0 : i32
    %c0_i32_0 = arith.constant 0 : i32
    return %arg0, %c0_i32 : i32, i32
  }
}

</mosaic_0001>

<llo_original>
// kernel: tpu_custom_call.1
$region0: #{tpu_custom_call.1}
  #allocation0 [shape = 'u32[]', space=smem, size = 0x4, offset = 0x4, fixed_abs, tag = 'smem constant byte address 0x4 - core index']
  #allocation1 [shape = 'u32[72,128]{1,0:T(1,128)}', space=vmem, size = 0x9000, scoped, tag = 'internal scratch']
  #allocation2 [shape = 'f32[1,1]{1,0:T(1,128)S(6)}', space=smem, size = 0x200, scoped, tag = 'scoped memory for tpu_custom_call.1']
  #allocation3 [shape = 'f32[1,1]{1,0:T(1,128)S(6)}', space=smem, size = 0x200, scoped, tag = 'scoped memory for tpu_custom_call.1']
  %s0 = inlined_call_operand.<no memory space> [shape: f32[1,1], index: 0, kind: input, shape index: {}]
  %s1 = inlined_call_operand.<no memory space> [shape: f32[1,1], index: 1, kind: input, shape index: {}]
  %s2 = inlined_call_operand.hbm [shape: f32[16,128], index: 2, kind: input, shape index: {}]
  %s3 = inlined_call_operand.hbm [shape: f32[16,128], index: 3, kind: output, shape index: {}]
  %s4 = sld [smem:[#allocation0]]
  $region49: #{tpu_custom_call.1} parent=0
    _
  %s6 = ssub.s32 1, %s4
  %s7 = scalar_select 0, %s6, %s4
  %8 = sst [smem:[#allocation2]] %s0
  %9 = sst [smem:[#allocation3]] %s1
  $region1: #{tpu_custom_call.1} parent=0
    #allocation4 [shape = 'u8[8192]{0}', space=vmem, size = 0x2000, scoped, tag = 'input window, operand 2']
    #allocation5 [shape = 's32[2]{0}', space=sflag, size = 0x8, scoped, tag = 'scoped memory for tpu_custom_call.1']
    #allocation6 [shape = 's32[2]{0}', space=sflag, size = 0x8, scoped, tag = 'scoped memory for tpu_custom_call.1']
    #allocation7 [shape = 'u8[8192]{0}', space=vmem, size = 0x2000, scoped, tag = 'output window, operand 0']
    %10 = vsyncpa [#allocation5], 0
    %s11 = scalar_lea.sflag [#allocation5], 1
    %12 = vsyncpa %s11, 0
    %13 = vsyncpa [#allocation6], 0
    %s14 = scalar_lea.sflag [#allocation6], 1
    %15 = vsyncpa %s14, 0
    loop: start=0, step=1, limit=4
    $region2: #{tpu_custom_call.1} parent=1 // loop_pre_header
      _
    $region3: #{tpu_custom_call.1} parent=1 // loop_header
      %s17 = sphi 0, %s21
      %p18 = scmp.ge.s32.totalorder %s17, 4
      %s25 = sphi 0, %s25
      %s27 = sphi 0, %s25
      %s28 = sphi 0, %s27
      %s42 = sphi 0, %s28
      %s46 = sphi 0, %s46
      %s48 = sphi 0, %s46
      %s49 = sphi 0, %s48
      %s63 = sphi 0, %s49
      %s69 = sphi 0, %s71
      %s72 = sphi 0, %s69
      %s73 = sphi 0, %s72
      %s89 = sphi 0, %s73
      %s95 = sphi 0, %s97
      %s98 = sphi 0, %s95
      %s99 = sphi 0, %s98
      %s115 = sphi 0, %s99
    $region4: #{tpu_custom_call.1} parent=1 // loop_header_branch
      %20 = sbr.rel (%p18) target = $region8
    $region5: #{tpu_custom_call.1} parent=1 // loop_body
      %s22 = ssub.s32 %s17, 1
      %s23 = ssub.s32 %s17, 2
      %s24 = sadd.s32 %s17, 1
      %s26 = sadd.s32 %s25, 1
      %p29 = scmp.eq.s32.totalorder %s17, 1
      %p30 = scmp.ne.s32.totalorder %s25, %s27
      %p31 = scmp.eq.s32.totalorder %s17, 0
      %p32 = por %p30, %p31
      %p33 = scmp.ne.s32.totalorder %s25, %s27
      %p34 = scmp.eq.s32.totalorder %s22, 1
      %p35 = por %p33, %p34
      %p36 = scmp.ne.s32.totalorder %s27, %s28
      %p37 = scmp.eq.s32.totalorder %s22, 0
      %p38 = por %p36, %p37
      %p39 = scmp.ne.s32.totalorder %s27, %s28
      %p40 = scmp.eq.s32.totalorder %s23, 1
      %p41 = por %p39, %p40
      %p43 = scmp.ne.s32.totalorder %s28, %s42
      %p44 = scmp.eq.s32.totalorder %s23, 0
      %p45 = por %p43, %p44
      %s47 = sadd.s32 %s46, 1
      %p50 = scmp.eq.s32.totalorder %s17, 1
      %p51 = scmp.ne.s32.totalorder %s46, %s48
      %p52 = scmp.eq.s32.totalorder %s17, 0
      %p53 = por %p51, %p52
      %p54 = scmp.ne.s32.totalorder %s46, %s48
      %p55 = scmp.eq.s32.totalorder %s22, 1
      %p56 = por %p54, %p55
      %p57 = scmp.ne.s32.totalorder %s48, %s49
      %p58 = scmp.eq.s32.totalorder %s22, 0
      %p59 = por %p57, %p58
      %p60 = scmp.ne.s32.totalorder %s48, %s49
      %p61 = scmp.eq.s32.totalorder %s23, 1
      %p62 = por %p60, %p61
      %p64 = scmp.ne.s32.totalorder %s49, %s63
      %p65 = scmp.eq.s32.totalorder %s23, 0
      %p66 = por %p64, %p65
      %s67 = ssub.s32 %s17, %s24
      %p68 = scmp.eq.s32.totalorder %s67, 0
      %s70 = sadd.s32 %s69, 1
      %s71 = scalar_select %p68, %s69, %s70
      %p74 = pneg %p68
      %p75 = scmp.eq.s32.totalorder %s17, 1
      %p76 = por %p74, %p75
      %p77 = scmp.ne.s32.totalorder %s69, %s72
      %p78 = scmp.eq.s32.totalorder %s17, 0
      %p79 = por %p77, %p78
      %p80 = scmp.ne.s32.totalorder %s69, %s72
      %p81 = scmp.eq.s32.totalorder %s22, 1
      %p82 = por %p80, %p81
      %p83 = scmp.ne.s32.totalorder %s72, %s73
      %p84 = scmp.eq.s32.totalorder %s22, 0
      %p85 = por %p83, %p84
      %p86 = scmp.ne.s32.totalorder %s72, %s73
      %p87 = scmp.eq.s32.totalorder %s23, 1
      %p88 = por %p86, %p87
      %p90 = scmp.ne.s32.totalorder %s73, %s89
      %p91 = scmp.eq.s32.totalorder %s23, 0
      %p92 = por %p90, %p91
      %s93 = ssub.s32 %s17, %s24
      %p94 = scmp.eq.s32.totalorder %s93, 0
      %s96 = sadd.s32 %s95, 1
      %s97 = scalar_select %p94, %s95, %s96
      %p100 = pneg %p94
      %p101 = scmp.eq.s32.totalorder %s17, 1
      %p102 = por %p100, %p101
      %p103 = scmp.ne.s32.totalorder %s95, %s98
      %p104 = scmp.eq.s32.totalorder %s17, 0
      %p105 = por %p103, %p104
      %p106 = scmp.ne.s32.totalorder %s95, %s98
      %p107 = scmp.eq.s32.totalorder %s22, 1
      %p108 = por %p106, %p107
      %p109 = scmp.ne.s32.totalorder %s98, %s99
      %p110 = scmp.eq.s32.totalorder %s22, 0
      %p111 = por %p109, %p110
      %p112 = scmp.ne.s32.totalorder %s98, %s99
      %p113 = scmp.eq.s32.totalorder %s23, 1
      %p114 = por %p112, %p113
      %p116 = scmp.ne.s32.totalorder %s99, %s115
      %p117 = scmp.eq.s32.totalorder %s23, 0
      %p118 = por %p116, %p117
      %p119 = scmp.le.s32.totalorder 1, %s17
      %p120 = scmp.lt.s32.totalorder %s17, 3
      %p121 = pnand %p119, %p120
      %p122 = pneg %p121
      // Predicated region
      $region9: #{tpu_custom_call.1} parent=5 // pred_check
        _
      $region10: #{tpu_custom_call.1} parent=5 // pred_check_branch
        %124 = sbr.rel (%p121) target = $region12
      $region11: #{tpu_custom_call.1} parent=5 // pred_region
        %s125 = ssub.s32 %s17, 1
        // Predicated region
        $region13: #{tpu_custom_call.1} parent=11 // pred_check
          %p126 = pneg %p38
        $region14: #{tpu_custom_call.1} parent=11 // pred_check_branch
          %128 = sbr.rel (%p126) target = $region16
        $region15: #{tpu_custom_call.1} parent=11 // pred_region
          _
        $region16: #{tpu_custom_call.1} parent=11 // pred_fallthru
          _
        // Predicated region
        $region17: #{tpu_custom_call.1} parent=11 // pred_check
          %p129 = pneg %p59
        $region18: #{tpu_custom_call.1} parent=11 // pred_check_branch
          %131 = sbr.rel (%p129) target = $region20
        $region19: #{tpu_custom_call.1} parent=11 // pred_region
          _
        $region20: #{tpu_custom_call.1} parent=11 // pred_fallthru
          _
      $region12: #{tpu_custom_call.1} parent=5 // pred_fallthru
        _
      %p132 = scmp.lt.s32.totalorder %s17, 2
      // Predicated region
      $region21: #{tpu_custom_call.1} parent=5 // pred_check
        %p133 = pneg %p132
      $region22: #{tpu_custom_call.1} parent=5 // pred_check_branch
        %135 = sbr.rel (%p133) target = $region24
      $region23: #{tpu_custom_call.1} parent=5 // pred_region
        // Predicated region
        $region25: #{tpu_custom_call.1} parent=23 // pred_check
          %p136 = pneg %p79
        $region26: #{tpu_custom_call.1} parent=23 // pred_check_branch
          %138 = sbr.rel (%p136) target = $region28
        $region27: #{tpu_custom_call.1} parent=23 // pred_region
          %s139 = sand.u32 %s69, 1
          %s140 = scalar_lea.sflag [#allocation5], %s139
          %s141 = sand.u32 %s69, 1
          %s142 = smul.addr %s141, 8
          %s143 = scalar_lea.vmem [#allocation4], %s142
          %145 = vsyncadd %s140, 0
          %s146 = smul.addr %s17, 8
          %s147 = scalar_lea.hbm %s2, %s146
          %s149 = sshll.u32 %s147, 4
          %s150 = int_to_ptr.hbm [resolvable:$true] %s149
          %s151 = sshll.u32 %s143, 4
          %s152 = int_to_ptr.vmem [resolvable:$true] %s151
          %154 = dma.hbm_to_vmem [thread:$0]  %s150, 128, %s152, %s140
        $region28: #{tpu_custom_call.1} parent=23 // pred_fallthru
          _
      $region24: #{tpu_custom_call.1} parent=5 // pred_fallthru
        _
      %p155 = scmp.le.s32.totalorder 1, %s17
      %p156 = scmp.lt.s32.totalorder %s17, 3
      %p157 = pnand %p155, %p156
      %p158 = pneg %p157
      // Predicated region
      $region29: #{tpu_custom_call.1} parent=5 // pred_check
        _
      $region30: #{tpu_custom_call.1} parent=5 // pred_check_branch
        %160 = sbr.rel (%p157) target = $region32
      $region31: #{tpu_custom_call.1} parent=5 // pred_region
        %s161 = ssub.s32 %s17, 1
        %s162 = sand.u32 %s72, 1
        %s163 = scalar_lea.sflag [#allocation5], %s162
        %s164 = sand.u32 %s72, 1
        %s165 = smul.addr %s164, 8
        %s166 = scalar_lea.vmem [#allocation4], %s165
        // Predicated region
        $region33: #{tpu_custom_call.1} parent=31 // pred_check
          %p167 = pneg %p85
        $region34: #{tpu_custom_call.1} parent=31 // pred_check_branch
          %169 = sbr.rel (%p167) target = $region36
        $region35: #{tpu_custom_call.1} parent=31 // pred_region
          %171 = dma.done %s163, 128
        $region36: #{tpu_custom_call.1} parent=31 // pred_fallthru
          _
        %p172 = pneg %p38
        %p173 = pneg %p35
        %p174 = pneg %p59
        %p175 = pneg %p56
        %s176 = sand.u32 %s72, 1
        %s177 = scalar_lea.sflag [#allocation5], %s176
        %s178 = sand.u32 %s72, 1
        %s179 = smul.addr %s178, 8
        %s180 = scalar_lea.vmem [#allocation4], %s179
        %p181 = pneg %p85
        %p182 = pneg %p82
        %p183 = pneg %p111
        %p184 = pneg %p108
        %s185 = sand.u32 %s98, 1
        %s186 = scalar_lea.sflag [#allocation6], %s185
        %s187 = sand.u32 %s98, 1
        %s188 = smul.addr %s187, 8
        %s189 = scalar_lea.vmem [#allocation7], %s188
        %s190 = sld [smem:[#allocation2]]
        %s191 = sld [smem:[#allocation3]]
        %v192 = vld [vmem:[%s166] sm:$0xff]
        %v193 = vstv %s190
        %v194 = vmul.f32 %v192, %v193
        %v195 = vstv %s191
        %v196 = vadd.f32 %v194, %v195
        %v197 = vmul.f32 %v196, 0.5
        %v198 = vtanh.pop %v197
        %v199 = vmul.f32 %v198, 0.5
        %v200 = vadd.f32 %v199, 0.5
        %201 = vst [vmem:[%s189] sm:$0xff] %v200
        %s202 = sand.u32 %s98, 1
        %s203 = scalar_lea.sflag [#allocation6], %s202
        %s204 = sand.u32 %s98, 1
        %s205 = smul.addr %s204, 8
        %s206 = scalar_lea.vmem [#allocation7], %s205
        // Predicated region
        $region37: #{tpu_custom_call.1} parent=31 // pred_check
          %p207 = pneg %p108
        $region38: #{tpu_custom_call.1} parent=31 // pred_check_branch
          %209 = sbr.rel (%p207) target = $region40
        $region39: #{tpu_custom_call.1} parent=31 // pred_region
          %211 = vsyncadd %s203, 0
          %s212 = smul.addr %s22, 8
          %s213 = scalar_lea.hbm %s3, %s212
          %s215 = sshll.u32 %s206, 4
          %s216 = int_to_ptr.vmem [resolvable:$true] %s215
          %s217 = sshll.u32 %s213, 4
          %s218 = int_to_ptr.hbm [resolvable:$true] %s217
          %220 = dma.vmem_to_hbm [thread:$0]  %s216, 128, %s218, %s203
        $region40: #{tpu_custom_call.1} parent=31 // pred_fallthru
          _
      $region32: #{tpu_custom_call.1} parent=5 // pred_fallthru
        _
      %p221 = scmp.le.s32.totalorder 2, %s17
      // Predicated region
      $region41: #{tpu_custom_call.1} parent=5 // pred_check
        %p222 = pneg %p221
      $region42: #{tpu_custom_call.1} parent=5 // pred_check_branch
        %224 = sbr.rel (%p222) target = $region44
      $region43: #{tpu_custom_call.1} parent=5 // pred_region
        %s225 = ssub.s32 %s17, 2
        // Predicated region
        $region45: #{tpu_custom_call.1} parent=43 // pred_check
          %p226 = pneg %p114
        $region46: #{tpu_custom_call.1} parent=43 // pred_check_branch
          %228 = sbr.rel (%p226) target = $region48
        $region47: #{tpu_custom_call.1} parent=43 // pred_region
          %s229 = sand.u32 %s99, 1
          %s230 = scalar_lea.sflag [#allocation6], %s229
          %s231 = sand.u32 %s99, 1
          %s232 = smul.addr %s231, 8
          %s233 = scalar_lea.vmem [#allocation7], %s232
          %235 = dma.done %s230, 128
        $region48: #{tpu_custom_call.1} parent=43 // pred_fallthru
          _
      $region44: #{tpu_custom_call.1} parent=5 // pred_fallthru
        _
    $region6: #{tpu_custom_call.1} parent=1 // loop_footer
      %s21 = sadd.s32 1, %s17
    $region7: #{tpu_custom_call.1} parent=1 // loop_footer_branch
      %16 = sbr.rel target = $region3
    $region8: #{tpu_custom_call.1} parent=1 // loop_exit
      _
    %236 = vsyncpa [#allocation5], 1
    %s237 = scalar_lea.sflag [#allocation5], 1
    %238 = vsyncpa %s237, 1
    %239 = vsyncpa [#allocation6], 1
    %s240 = scalar_lea.sflag [#allocation6], 1
    %241 = vsyncpa %s240, 1

</llo_original>
